<compile_context>
chip_gen: v5e
topology: v5e:2x2
jax: 0.10.0
libtpu: 0.0.40
codegen_flags: <defaults>
</compile_context>

<pallas_src>
import functools

import jax
import jax.numpy as jnp
from jax import lax
from jax.experimental import pallas as pl
from jax.experimental.pallas import tpu as pltpu


# ---------------------------------------------------------------------------
# Chunk / block sizing helpers
# ---------------------------------------------------------------------------


def _pick_chunk(hw, cg):
    """Largest multiple-of-128 lane chunk dividing hw whose f32 working set
    (cg*chunk*4 B) stays <= ~512 KiB.  Falls back to the whole hw."""
    if hw % 128 != 0:
        # TODO(synk): pad HW to a lane multiple in the wrapper (e.g. 14x14=196
        # feature maps) to avoid masked partial stores.
        return hw
    cap = max(128, min(2048, ((512 * 1024) // (4 * max(cg, 1))) // 128 * 128))
    best = 128
    c = 256
    while c <= min(hw, cap):
        if hw % c == 0:
            best = c
        c += 128
    return best


def _pick_hw_block(hw, cg, elem_bytes, max_bytes):
    """HW block for the tiled path: a divisor of hw, preferably a multiple of
    128, with cg*blk*elem_bytes <= max_bytes."""
    max_lanes = max(1, max_bytes // (cg * elem_bytes))
    best = 0
    c = 128
    lim = min(hw, (max_lanes // 128) * 128)
    while c <= lim:
        if hw % c == 0:
            best = c
        c += 128
    if best:
        return best
    d = min(hw, max_lanes)
    while d > 1 and hw % d != 0:
        d -= 1
    return max(d, 1)


# ---------------------------------------------------------------------------
# Fused single-pass path: one (batch, group) block per grid step.
# ---------------------------------------------------------------------------


def _gbn_fused_kernel(x_ref, w_ref, b_ref, o_ref, *, eps, inv_n, inv_nm1,
                      chunk, n_chunks):
    # x_ref, o_ref: (Cg, HW) in the I/O dtype; w_ref, b_ref: (Cg, 1) f32.
    cg = x_ref.shape[0]
    unroll = n_chunks <= 8

    # Pass 1: mean.  Widen per chunk only -> no full-block f32 copy is live.
    def sum_body(i, acc):
        start = pl.multiple_of(i * chunk, chunk)
        xc = x_ref[:, pl.ds(start, chunk)].astype(jnp.float32)
        return acc + jnp.sum(xc, axis=(0, 1), keepdims=True)

    s1 = lax.fori_loop(0, n_chunks, sum_body,
                       jnp.zeros((1, 1), jnp.float32), unroll=unroll)
    mean = s1 * inv_n                                       # (1, 1)

    # Pass 2: centered sum of squares (two-pass -> no cancellation; VMEM
    # re-reads are essentially free in this HBM-bound kernel).
    def ssq_body(i, acc):
        start = pl.multiple_of(i * chunk, chunk)
        xc = x_ref[:, pl.ds(start, chunk)].astype(jnp.float32)
        d = xc - mean
        return acc + jnp.sum(d * d, axis=(0, 1), keepdims=True)

    ssq = lax.fori_loop(0, n_chunks, ssq_body,
                        jnp.zeros((1, 1), jnp.float32), unroll=unroll)
    var = jnp.maximum(ssq * inv_nm1, 0.0)                   # unbiased (n-1), clamped
    inv = 1.0 / (jnp.sqrt(var) + eps)                       # one divide per group

    # Fold 1/(std+eps) into the per-channel affine -> one FMA per element,
    # applied in the I/O dtype.  Hoist the (Cg, chunk) lane broadcast out of
    # the loop (JAX does not CSE broadcast_in_dim).
    w = w_ref[...]                                          # (Cg, 1) f32
    b = b_ref[...]
    scale = w * inv                                         # (Cg, 1)
    shift = b - mean * scale
    scale_b = jnp.broadcast_to(scale.astype(o_ref.dtype), (cg, chunk))
    shift_b = jnp.broadcast_to(shift.astype(o_ref.dtype), (cg, chunk))

    # Pass 3: apply.
    def apply_body(i, carry):
        start = pl.multiple_of(i * chunk, chunk)
        xc = x_ref[:, pl.ds(start, chunk)]
        o_ref[:, pl.ds(start, chunk)] = xc * scale_b + shift_b
        return carry

    lax.fori_loop(0, n_chunks, apply_body, 0, unroll=unroll)


def _group_bn_fused(xg, wg, bg, *, eps, chunk_lanes=None):
    N, G, Cg, HW = xg.shape
    n_elem = Cg * HW
    if chunk_lanes is not None and HW % int(chunk_lanes) == 0:
        chunk = int(chunk_lanes)
    else:
        chunk = _pick_chunk(HW, Cg)
    n_chunks = HW // chunk

    elem_bytes = jnp.dtype(xg.dtype).itemsize
    x_spec = pl.BlockSpec((None, None, Cg, HW), lambda n, g: (n, g, 0, 0))
    p_spec = pl.BlockSpec((None, Cg, 1), lambda n, g: (g, 0, 0))

    cost = pl.CostEstimate(
        flops=int(6 * N * G * n_elem),
        transcendentals=int(N * G),
        bytes_accessed=int(2 * xg.size * elem_bytes + (wg.size + bg.size) * 4),
    )

    kernel = functools.partial(
        _gbn_fused_kernel, eps=float(eps),
        inv_n=1.0 / n_elem, inv_nm1=1.0 / (n_elem - 1),
        chunk=chunk, n_chunks=n_chunks)

    return pl.pallas_call(
        kernel,
        out_shape=jax.ShapeDtypeStruct(xg.shape, xg.dtype),
        grid=(N, G),
        in_specs=[x_spec, p_spec, p_spec],
        out_specs=x_spec,
        compiler_params=pltpu.CompilerParams(
            dimension_semantics=("parallel", "parallel"),
            vmem_limit_bytes=32 * 1024 * 1024,
        ),
        cost_estimate=cost,
    )(xg, wg, bg)


# ---------------------------------------------------------------------------
# HW-tiled two-pass fallback: groups too large for a single VMEM block.
# ---------------------------------------------------------------------------


def _gbn_stats_kernel(x_ref, s1_ref, s2_ref):
    # x_ref: (Cg, hw_blk); s1_ref, s2_ref: (1, 1) f32 accumulators that stay
    # resident across the "arbitrary" HW grid axis.
    @pl.when(pl.program_id(2) == 0)
    def _():
        s1_ref[...] = jnp.zeros_like(s1_ref)
        s2_ref[...] = jnp.zeros_like(s2_ref)

    xb = x_ref[...].astype(jnp.float32)
    s1_ref[...] += jnp.sum(xb, axis=(0, 1), keepdims=True)
    s2_ref[...] += jnp.sum(xb * xb, axis=(0, 1), keepdims=True)


def _gbn_apply_kernel(x_ref, scale_ref, shift_ref, o_ref):
    # x_ref, o_ref: (Cg, hw_blk); scale_ref, shift_ref: (Cg, 1) in the I/O dtype.
    o_ref[...] = x_ref[...] * scale_ref[...] + shift_ref[...]


def _group_bn_tiled(xg, wg, bg, *, eps, max_block_bytes):
    N, G, Cg, HW = xg.shape
    n_elem = Cg * HW
    elem_bytes = jnp.dtype(xg.dtype).itemsize
    hw_blk = _pick_hw_block(HW, Cg, elem_bytes, max_block_bytes)
    n_hw = HW // hw_blk

    x_spec = pl.BlockSpec((None, None, Cg, hw_blk), lambda n, g, h: (n, g, 0, h))
    s_spec = pl.BlockSpec((None, None, 1, 1), lambda n, g, h: (n, g, 0, 0))

    # Pass 1: per-group running sums (one-pass s1/s2; clamped below).
    s1, s2 = pl.pallas_call(
        _gbn_stats_kernel,
        out_shape=(jax.ShapeDtypeStruct((N, G, 1, 1), jnp.float32),
                   jax.ShapeDtypeStruct((N, G, 1, 1), jnp.float32)),
        grid=(N, G, n_hw),
        in_specs=[x_spec],
        out_specs=(s_spec, s_spec),
        compiler_params=pltpu.CompilerParams(
            dimension_semantics=("parallel", "parallel", "arbitrary"),
            vmem_limit_bytes=32 * 1024 * 1024,
        ),
    )(xg)

    # Tiny O(N*C) scalar fold in plain JAX between the two passes.
    s1 = s1[:, :, 0, 0]
    s2 = s2[:, :, 0, 0]
    mean = s1 / n_elem
    var = jnp.maximum((s2 - mean * s1) / (n_elem - 1), 0.0)
    inv = 1.0 / (jnp.sqrt(var) + eps)
    scale = wg[None, :, :, 0] * inv[:, :, None]              # (N, G, Cg)
    shift = bg[None, :, :, 0] - mean[:, :, None] * scale
    scale = scale.astype(xg.dtype)[..., None]                # (N, G, Cg, 1)
    shift = shift.astype(xg.dtype)[..., None]

    p_spec = pl.BlockSpec((None, None, Cg, 1), lambda n, g, h: (n, g, 0, 0))

    # Pass 2: apply the folded per-channel affine in the I/O dtype.
    return pl.pallas_call(
        _gbn_apply_kernel,
        out_shape=jax.ShapeDtypeStruct(xg.shape, xg.dtype),
        grid=(N, G, n_hw),
        in_specs=[x_spec, p_spec, p_spec],
        out_specs=x_spec,
        compiler_params=pltpu.CompilerParams(
            dimension_semantics=("parallel", "parallel", "parallel"),
            vmem_limit_bytes=32 * 1024 * 1024,
        ),
    )(xg, scale, shift)


# ---------------------------------------------------------------------------
# Public wrapper
# ---------------------------------------------------------------------------


def group_batchnorm2d(x, weight, bias, group_num: int, eps: float = 1e-10, *,
                      max_group_block_bytes: int = 2 * 1024 * 1024,
                      chunk_lanes=None):
    """x: (N, C, H, W); weight, bias: (C, 1, 1).  Returns (N, C, H, W)."""
    N, C, H, W = x.shape
    G = int(group_num)
    assert C >= G and C % G == 0
    Cg = C // G
    HW = H * W
    n_elem = Cg * HW
    assert n_elem > 1, "unbiased std needs more than one element per group"

    elem_bytes = jnp.dtype(x.dtype).itemsize
    # Lane-dense layout: NCHW is already contiguous as (N, G, Cg, H*W).
    xg = x.reshape(N, G, Cg, HW)
    wg = weight.reshape(G, Cg, 1).astype(jnp.float32)
    bg = bias.reshape(G, Cg, 1).astype(jnp.float32)

    group_bytes = Cg * HW * elem_bytes
    if group_bytes <= max_group_block_bytes:
        out = _group_bn_fused(xg, wg, bg, eps=eps, chunk_lanes=chunk_lanes)
    else:
        out = _group_bn_tiled(xg, wg, bg, eps=eps,
                              max_block_bytes=min(max_group_block_bytes, 1 << 20))
    return out.reshape(N, C, H, W)


def _reference(x, weight, bias, group_num, eps=1e-10):
    # Pure-JAX reference mirroring the PyTorch forward exactly
    # (unbiased std, eps added to std, per-channel affine).
    N, C, H, W = x.shape
    xr = x.reshape(N, group_num, -1).astype(jnp.float32)
    mean = jnp.mean(xr, axis=2, keepdims=True)
    var = jnp.sum((xr - mean) ** 2, axis=2, keepdims=True) / (xr.shape[2] - 1)
    std = jnp.sqrt(var)
    xn = ((xr - mean) / (std + eps)).reshape(N, C, H, W)
    return xn * weight.reshape(1, C, 1, 1) + bias.reshape(1, C, 1, 1)


if __name__ == "__main__":
    key = jax.random.PRNGKey(0)
    k_x, k_w = jax.random.split(key)

    N, C, H, W = 2, 8, 16, 16
    group_num = 4
    eps = 1e-10

    x = jax.random.normal(k_x, (N, C, H, W), dtype=jnp.float32)
    # Parameter shapes match the module's __init__: weight ~ randn(C,1,1), bias = 0.
    weight = jax.random.normal(k_w, (C, 1, 1), dtype=jnp.float32)
    bias = jnp.zeros((C, 1, 1), dtype=jnp.float32)

    ref = _reference(x, weight, bias, group_num, eps)

    # 1) Fused single-pass path (default).
    out = jax.block_until_ready(group_batchnorm2d(x, weight, bias, group_num, eps))
    assert out.shape == (N, C, H, W)
    assert jnp.allclose(out, ref, atol=1e-4, rtol=1e-4), "fused path mismatch"

    # 2) Fused path with a forced multi-chunk inner loop (exercises the
    #    chunked fori_loop reduction + apply).
    out_c = jax.block_until_ready(
        group_batchnorm2d(x, weight, bias, group_num, eps, chunk_lanes=128))
    assert jnp.allclose(out_c, ref, atol=1e-4, rtol=1e-4), "chunked path mismatch"

    # 3) HW-tiled two-pass fallback (forced via a tiny block budget).
    out_t = jax.block_until_ready(
        group_batchnorm2d(x, weight, bias, group_num, eps,
                          max_group_block_bytes=1024))
    assert jnp.allclose(out_t, ref, atol=1e-4, rtol=1e-4), "tiled path mismatch"

    print("KERNEL_OK")
</pallas_src>

<mosaic_0001>
module attributes {stable_mosaic.version = 11 : i64} {
  func.func @_gbn_fused_kernel(%arg0: i32, %arg1: i32, %arg2: memref<1x1x2x256xf32, #tpu.memory_space<vmem>>, %arg3: memref<1x2x1xf32, #tpu.memory_space<vmem>>, %arg4: memref<1x2x1xf32, #tpu.memory_space<vmem>>, %arg5: memref<1x1x2x256xf32, #tpu.memory_space<vmem>>) attributes {dimension_semantics = [#tpu.dimension_semantics<parallel>, #tpu.dimension_semantics<parallel>], iteration_bounds = array<i64: 2, 4>, scalar_prefetch = 0 : i64, scratch_operands = 0 : i64, tpu.core_type = #tpu.core_type<tc>, window_params = [{transform_indices = @transform_0, window_bounds = array<i64: 1, 1, 2, 256>}, {transform_indices = @transform_1, window_bounds = array<i64: 1, 2, 1>}, {transform_indices = @transform_2, window_bounds = array<i64: 1, 2, 1>}, {transform_indices = @transform_3, window_bounds = array<i64: 1, 1, 2, 256>}]} {
    %cst = arith.constant 0.000000e+00 : f32
    %0 = vector.broadcast %cst : f32 to vector<1x1xf32>
    %c0_i32 = arith.constant 0 : i32
    %c256_i32 = arith.constant 256 : i32
    %1 = arith.muli %c0_i32, %c256_i32 : i32
    %2 = tpu.assume_multiple %1, 256 : i32
    %c0 = arith.constant 0 : index
    %c0_0 = arith.constant 0 : index
    %c0_1 = arith.constant 0 : index
    %3 = arith.index_cast %2 : i32 to index
    %4 = vector.load %arg2[%c0, %c0_0, %c0_1, %3] : memref<1x1x2x256xf32, #tpu.memory_space<vmem>>, vector<1x1x2x256xf32>
    %5 = vector.shape_cast %4 : vector<1x1x2x256xf32> to vector<2x256xf32>
    %6 = vector.shape_cast %5 : vector<2x256xf32> to vector<1x2x256xf32>
    %cst_2 = arith.constant dense<0.000000e+00> : vector<1xf32>
    %7 = vector.multi_reduction <add>, %6, %cst_2 [1, 2] : vector<1x2x256xf32> to vector<1xf32>
    %8 = vector.shape_cast %7 : vector<1xf32> to vector<1x1x1xf32>
    %9 = vector.extract %8[0, 0, 0] : f32 from vector<1x1x1xf32>
    %10 = vector.broadcast %9 : f32 to vector<1x1xf32>
    %11 = arith.addf %0, %10 : vector<1x1xf32>
    %c1_i32 = arith.constant 1 : i32
    %cst_3 = arith.constant 0.001953125 : f32
    %12 = vector.broadcast %cst_3 : f32 to vector<1x1xf32>
    %13 = arith.mulf %11, %12 : vector<1x1xf32>
    %cst_4 = arith.constant 0.000000e+00 : f32
    %14 = vector.broadcast %cst_4 : f32 to vector<1x1xf32>
    %c0_i32_5 = arith.constant 0 : i32
    %c256_i32_6 = arith.constant 256 : i32
    %15 = arith.muli %c0_i32_5, %c256_i32_6 : i32
    %16 = tpu.assume_multiple %15, 256 : i32
    %c0_7 = arith.constant 0 : index
    %c0_8 = arith.constant 0 : index
    %c0_9 = arith.constant 0 : index
    %17 = arith.index_cast %16 : i32 to index
    %18 = vector.load %arg2[%c0_7, %c0_8, %c0_9, %17] : memref<1x1x2x256xf32, #tpu.memory_space<vmem>>, vector<1x1x2x256xf32>
    %19 = vector.shape_cast %18 : vector<1x1x2x256xf32> to vector<2x256xf32>
    %20 = vector.broadcast %13 : vector<1x1xf32> to vector<2x256xf32>
    %21 = arith.subf %19, %20 : vector<2x256xf32>
    %22 = arith.mulf %21, %21 : vector<2x256xf32>
    %23 = vector.shape_cast %22 : vector<2x256xf32> to vector<1x2x256xf32>
    %cst_10 = arith.constant dense<0.000000e+00> : vector<1xf32>
    %24 = vector.multi_reduction <add>, %23, %cst_10 [1, 2] : vector<1x2x256xf32> to vector<1xf32>
    %25 = vector.shape_cast %24 : vector<1xf32> to vector<1x1x1xf32>
    %26 = vector.extract %25[0, 0, 0] : f32 from vector<1x1x1xf32>
    %27 = vector.broadcast %26 : f32 to vector<1x1xf32>
    %28 = arith.addf %14, %27 : vector<1x1xf32>
    %c1_i32_11 = arith.constant 1 : i32
    %cst_12 = arith.constant 0.00195694715 : f32
    %29 = vector.broadcast %cst_12 : f32 to vector<1x1xf32>
    %30 = arith.mulf %28, %29 : vector<1x1xf32>
    %cst_13 = arith.constant 0.000000e+00 : f32
    %31 = vector.broadcast %cst_13 : f32 to vector<1x1xf32>
    %32 = arith.maximumf %30, %31 : vector<1x1xf32>
    %33 = math.sqrt %32 : vector<1x1xf32>
    %cst_14 = arith.constant 1.000000e-10 : f32
    %34 = vector.broadcast %cst_14 : f32 to vector<1x1xf32>
    %35 = arith.addf %33, %34 : vector<1x1xf32>
    %cst_15 = arith.constant 1.000000e+00 : f32
    %36 = vector.broadcast %cst_15 : f32 to vector<1x1xf32>
    %37 = arith.divf %36, %35 : vector<1x1xf32>
    %c0_16 = arith.constant 0 : index
    %c0_17 = arith.constant 0 : index
    %c0_18 = arith.constant 0 : index
    %38 = vector.load %arg3[%c0_16, %c0_17, %c0_18] : memref<1x2x1xf32, #tpu.memory_space<vmem>>, vector<1x2x1xf32>
    %39 = vector.shape_cast %38 : vector<1x2x1xf32> to vector<2x1xf32>
    %c0_19 = arith.constant 0 : index
    %c0_20 = arith.constant 0 : index
    %c0_21 = arith.constant 0 : index
    %40 = vector.load %arg4[%c0_19, %c0_20, %c0_21] : memref<1x2x1xf32, #tpu.memory_space<vmem>>, vector<1x2x1xf32>
    %41 = vector.shape_cast %40 : vector<1x2x1xf32> to vector<2x1xf32>
    %42 = vector.broadcast %37 : vector<1x1xf32> to vector<2x1xf32>
    %43 = arith.mulf %39, %42 : vector<2x1xf32>
    %44 = vector.broadcast %13 : vector<1x1xf32> to vector<2x1xf32>
    %45 = arith.mulf %44, %43 : vector<2x1xf32>
    %46 = arith.subf %41, %45 : vector<2x1xf32>
    %47 = vector.shape_cast %43 : vector<2x1xf32> to vector<2x1xf32>
    %48 = vector.broadcast %47 : vector<2x1xf32> to vector<2x256xf32>
    %49 = vector.shape_cast %46 : vector<2x1xf32> to vector<2x1xf32>
    %50 = vector.broadcast %49 : vector<2x1xf32> to vector<2x256xf32>
    %c0_i32_22 = arith.constant 0 : i32
    %c256_i32_23 = arith.constant 256 : i32
    %51 = arith.muli %c0_i32_22, %c256_i32_23 : i32
    %52 = tpu.assume_multiple %51, 256 : i32
    %c0_24 = arith.constant 0 : index
    %c0_25 = arith.constant 0 : index
    %c0_26 = arith.constant 0 : index
    %53 = arith.index_cast %52 : i32 to index
    %54 = vector.load %arg2[%c0_24, %c0_25, %c0_26, %53] : memref<1x1x2x256xf32, #tpu.memory_space<vmem>>, vector<1x1x2x256xf32>
    %55 = vector.shape_cast %54 : vector<1x1x2x256xf32> to vector<2x256xf32>
    %56 = arith.mulf %55, %48 : vector<2x256xf32>
    %57 = arith.addf %56, %50 : vector<2x256xf32>
    %c0_27 = arith.constant 0 : index
    %c0_28 = arith.constant 0 : index
    %c0_29 = arith.constant 0 : index
    %58 = arith.index_cast %52 : i32 to index
    %59 = vector.load %arg5[%c0_27, %c0_28, %c0_29, %58] : memref<1x1x2x256xf32, #tpu.memory_space<vmem>>, vector<1x1x2x256xf32>
    %60 = vector.shape_cast %59 : vector<1x1x2x256xf32> to vector<2x256xf32>
    %61 = vector.shape_cast %57 : vector<2x256xf32> to vector<1x1x2x256xf32>
    tpu.vector_store %arg5[%c0_27, %c0_28, %c0_29, %58], %61 {strides = array<i32>} : memref<1x1x2x256xf32, #tpu.memory_space<vmem>>, vector<1x1x2x256xf32>,
    %c1_i32_30 = arith.constant 1 : i32
    return
  }
  func.func @transform_0(%arg0: i32, %arg1: i32) -> (i32, i32, i32, i32) {
    %c0_i32 = arith.constant 0 : i32
    %c0_i32_0 = arith.constant 0 : i32
    %c0_i32_1 = arith.constant 0 : i32
    return %arg0, %arg1, %c0_i32, %c0_i32_0 : i32, i32, i32, i32
  }
  func.func @transform_1(%arg0: i32, %arg1: i32) -> (i32, i32, i32) {
    %c0_i32 = arith.constant 0 : i32
    %c0_i32_0 = arith.constant 0 : i32
    %c0_i32_1 = arith.constant 0 : i32
    return %arg1, %c0_i32, %c0_i32_0 : i32, i32, i32
  }
  func.func @transform_2(%arg0: i32, %arg1: i32) -> (i32, i32, i32) {
    %c0_i32 = arith.constant 0 : i32
    %c0_i32_0 = arith.constant 0 : i32
    %c0_i32_1 = arith.constant 0 : i32
    return %arg1, %c0_i32, %c0_i32_0 : i32, i32, i32
  }
  func.func @transform_3(%arg0: i32, %arg1: i32) -> (i32, i32, i32, i32) {
    %c0_i32 = arith.constant 0 : i32
    %c0_i32_0 = arith.constant 0 : i32
    %c0_i32_1 = arith.constant 0 : i32
    return %arg0, %arg1, %c0_i32, %c0_i32_0 : i32, i32, i32, i32
  }
}

</mosaic_0001>

<llo_original>
// kernel: tpu_custom_call.1
$region0: #{tpu_custom_call.1}
  #allocation0 [shape = 'u32[]', space=smem, size = 0x4, offset = 0x4, fixed_abs, tag = 'smem constant byte address 0x4 - core index']
  #allocation1 [shape = 'u32[72,128]{1,0:T(1,128)}', space=vmem, size = 0x9000, scoped, tag = 'internal scratch']
  %s0 = inlined_call_operand.hbm [shape: f32[2,4,2,256], index: 0, kind: input, shape index: {}]
  %s1 = inlined_call_operand.vmem [shape: f32[4,2,1], index: 1, kind: input, shape index: {}]
  %s2 = inlined_call_operand.vmem [shape: f32[4,2,1], index: 2, kind: input, shape index: {}]
  %s3 = inlined_call_operand.hbm [shape: f32[2,4,2,256], index: 3, kind: output, shape index: {}]
  %s4 = sld [smem:[#allocation0]]
  $region49: #{tpu_custom_call.1} parent=0
    _
  %s6 = ssub.s32 1, %s4
  %s7 = scalar_select 0, %s6, %s4
  $region1: #{tpu_custom_call.1} parent=0
    #allocation2 [shape = 'u8[4096]{0}', space=vmem, size = 0x1000, scoped, tag = 'input window, operand 0']
    #allocation3 [shape = 's32[2]{0}', space=sflag, size = 0x8, scoped, tag = 'scoped memory for tpu_custom_call.1']
    #allocation4 [shape = 's32[2]{0}', space=sflag, size = 0x8, scoped, tag = 'scoped memory for tpu_custom_call.1']
    #allocation5 [shape = 'u8[4096]{0}', space=vmem, size = 0x1000, scoped, tag = 'output window, operand 0']
    %8 = vsyncpa [#allocation3], 0
    %s9 = scalar_lea.sflag [#allocation3], 1
    %10 = vsyncpa %s9, 0
    %11 = vsyncpa [#allocation4], 0
    %s12 = scalar_lea.sflag [#allocation4], 1
    %13 = vsyncpa %s12, 0
    loop: start=0, step=1, limit=10
    $region2: #{tpu_custom_call.1} parent=1 // loop_pre_header
      _
    $region3: #{tpu_custom_call.1} parent=1 // loop_header
      %s15 = sphi 0, %s19
      %p16 = scmp.ge.s32.totalorder %s15, 10
      %s22 = sphi 0, %s34
      %s23 = sphi 0, %s30
      %s24 = sphi 0, %s22
      %s25 = sphi 0, %s23
      %s26 = sphi 0, %s24
      %s27 = sphi 0, %s25
      %s39 = sphi 0, %s41
      %s42 = sphi 0, %s39
      %s43 = sphi 0, %s42
      %s59 = sphi 0, %s43
      %s65 = sphi 0, %s67
      %s68 = sphi 0, %s65
      %s69 = sphi 0, %s68
      %s85 = sphi 0, %s69
      %s91 = sphi 0, %s93
      %s94 = sphi 0, %s91
      %s95 = sphi 0, %s94
      %s111 = sphi 0, %s95
      %s119 = sphi 0, %s121
      %s122 = sphi 0, %s119
      %s123 = sphi 0, %s122
      %s139 = sphi 0, %s123
    $region4: #{tpu_custom_call.1} parent=1 // loop_header_branch
      %18 = sbr.rel (%p16) target = $region8
    $region5: #{tpu_custom_call.1} parent=1 // loop_body
      %s20 = ssub.s32 %s15, 1
      %s21 = ssub.s32 %s15, 2
      %s28 = sadd.s32 1, %s23
      %p29 = scmp.ge.s32.totalorder %s28, 4
      %s30 = scalar_select %p29, 0, %s28
      %s31 = sadd.s32 1, %s22
      %s32 = scalar_select %p29, %s31, %s22
      %p33 = scmp.ge.s32.totalorder %s32, 2
      %s34 = scalar_select %p33, 0, %s32
      %s35 = ssub.s32 %s22, %s34
      %s36 = ssub.s32 %s23, %s30
      %s37 = sor.u32 %s35, %s36
      %p38 = scmp.eq.s32.totalorder %s37, 0
      %s40 = sadd.s32 %s39, 1
      %s41 = scalar_select %p38, %s39, %s40
      %p44 = pneg %p38
      %p45 = scmp.eq.s32.totalorder %s15, 7
      %p46 = por %p44, %p45
      %p47 = scmp.ne.s32.totalorder %s39, %s42
      %p48 = scmp.eq.s32.totalorder %s15, 0
      %p49 = por %p47, %p48
      %p50 = scmp.ne.s32.totalorder %s39, %s42
      %p51 = scmp.eq.s32.totalorder %s20, 7
      %p52 = por %p50, %p51
      %p53 = scmp.ne.s32.totalorder %s42, %s43
      %p54 = scmp.eq.s32.totalorder %s20, 0
      %p55 = por %p53, %p54
      %p56 = scmp.ne.s32.totalorder %s42, %s43
      %p57 = scmp.eq.s32.totalorder %s21, 7
      %p58 = por %p56, %p57
      %p60 = scmp.ne.s32.totalorder %s43, %s59
      %p61 = scmp.eq.s32.totalorder %s21, 0
      %p62 = por %p60, %p61
      %s63 = ssub.s32 %s23, %s30
      %p64 = scmp.eq.s32.totalorder %s63, 0
      %s66 = sadd.s32 %s65, 1
      %s67 = scalar_select %p64, %s65, %s66
      %p70 = pneg %p64
      %p71 = scmp.eq.s32.totalorder %s15, 7
      %p72 = por %p70, %p71
      %p73 = scmp.ne.s32.totalorder %s65, %s68
      %p74 = scmp.eq.s32.totalorder %s15, 0
      %p75 = por %p73, %p74
      %p76 = scmp.ne.s32.totalorder %s65, %s68
      %p77 = scmp.eq.s32.totalorder %s20, 7
      %p78 = por %p76, %p77
      %p79 = scmp.ne.s32.totalorder %s68, %s69
      %p80 = scmp.eq.s32.totalorder %s20, 0
      %p81 = por %p79, %p80
      %p82 = scmp.ne.s32.totalorder %s68, %s69
      %p83 = scmp.eq.s32.totalorder %s21, 7
      %p84 = por %p82, %p83
      %p86 = scmp.ne.s32.totalorder %s69, %s85
      %p87 = scmp.eq.s32.totalorder %s21, 0
      %p88 = por %p86, %p87
      %s89 = ssub.s32 %s23, %s30
      %p90 = scmp.eq.s32.totalorder %s89, 0
      %s92 = sadd.s32 %s91, 1
      %s93 = scalar_select %p90, %s91, %s92
      %p96 = pneg %p90
      %p97 = scmp.eq.s32.totalorder %s15, 7
      %p98 = por %p96, %p97
      %p99 = scmp.ne.s32.totalorder %s91, %s94
      %p100 = scmp.eq.s32.totalorder %s15, 0
      %p101 = por %p99, %p100
      %p102 = scmp.ne.s32.totalorder %s91, %s94
      %p103 = scmp.eq.s32.totalorder %s20, 7
      %p104 = por %p102, %p103
      %p105 = scmp.ne.s32.totalorder %s94, %s95
      %p106 = scmp.eq.s32.totalorder %s20, 0
      %p107 = por %p105, %p106
      %p108 = scmp.ne.s32.totalorder %s94, %s95
      %p109 = scmp.eq.s32.totalorder %s21, 7
      %p110 = por %p108, %p109
      %p112 = scmp.ne.s32.totalorder %s95, %s111
      %p113 = scmp.eq.s32.totalorder %s21, 0
      %p114 = por %p112, %p113
      %s115 = ssub.s32 %s22, %s34
      %s116 = ssub.s32 %s23, %s30
      %s117 = sor.u32 %s115, %s116
      %p118 = scmp.eq.s32.totalorder %s117, 0
      %s120 = sadd.s32 %s119, 1
      %s121 = scalar_select %p118, %s119, %s120
      %p124 = pneg %p118
      %p125 = scmp.eq.s32.totalorder %s15, 7
      %p126 = por %p124, %p125
      %p127 = scmp.ne.s32.totalorder %s119, %s122
      %p128 = scmp.eq.s32.totalorder %s15, 0
      %p129 = por %p127, %p128
      %p130 = scmp.ne.s32.totalorder %s119, %s122
      %p131 = scmp.eq.s32.totalorder %s20, 7
      %p132 = por %p130, %p131
      %p133 = scmp.ne.s32.totalorder %s122, %s123
      %p134 = scmp.eq.s32.totalorder %s20, 0
      %p135 = por %p133, %p134
      %p136 = scmp.ne.s32.totalorder %s122, %s123
      %p137 = scmp.eq.s32.totalorder %s21, 7
      %p138 = por %p136, %p137
      %p140 = scmp.ne.s32.totalorder %s123, %s139
      %p141 = scmp.eq.s32.totalorder %s21, 0
      %p142 = por %p140, %p141
      %p143 = scmp.le.s32.totalorder 1, %s15
      %p144 = scmp.lt.s32.totalorder %s15, 9
      %p145 = pnand %p143, %p144
      %p146 = pneg %p145
      // Predicated region
      $region9: #{tpu_custom_call.1} parent=5 // pred_check
        _
      $region10: #{tpu_custom_call.1} parent=5 // pred_check_branch
        %148 = sbr.rel (%p145) target = $region12
      $region11: #{tpu_custom_call.1} parent=5 // pred_region
        %s149 = ssub.s32 %s15, 1
      $region12: #{tpu_custom_call.1} parent=5 // pred_fallthru
        _
      %p150 = scmp.lt.s32.totalorder %s15, 8
      // Predicated region
      $region13: #{tpu_custom_call.1} parent=5 // pred_check
        %p151 = pneg %p150
      $region14: #{tpu_custom_call.1} parent=5 // pred_check_branch
        %153 = sbr.rel (%p151) target = $region16
      $region15: #{tpu_custom_call.1} parent=5 // pred_region
        // Predicated region
        $region17: #{tpu_custom_call.1} parent=15 // pred_check
          %p154 = pneg %p49
        $region18: #{tpu_custom_call.1} parent=15 // pred_check_branch
          %156 = sbr.rel (%p154) target = $region20
        $region19: #{tpu_custom_call.1} parent=15 // pred_region
          %s157 = sand.u32 %s39, 1
          %s158 = scalar_lea.sflag [#allocation3], %s157
          %s159 = sand.u32 %s39, 1
          %s160 = smul.addr %s159, 4
          %s161 = scalar_lea.vmem [#allocation2], %s160
          %163 = vsyncadd %s158, 0
          %s164 = smul.addr %s23, 2
          %s165 = smul.addr %s22, 8
          %s166 = sadd.s32 %s164, %s165
          %s167 = smul.addr %s166, 2
          %s168 = scalar_lea.hbm %s0, %s167
          %s170 = sshll.u32 %s168, 4
          %s171 = int_to_ptr.hbm [resolvable:$true] %s170
          %s172 = sshll.u32 %s161, 4
          %s173 = int_to_ptr.vmem [resolvable:$true] %s172
          %175 = dma.hbm_to_vmem [thread:$0]  %s171, 64, %s173, %s158
        $region20: #{tpu_custom_call.1} parent=15 // pred_fallthru
          _
        // Predicated region
        $region21: #{tpu_custom_call.1} parent=15 // pred_check
          %p176 = pneg %p75
        $region22: #{tpu_custom_call.1} parent=15 // pred_check_branch
          %178 = sbr.rel (%p176) target = $region24
        $region23: #{tpu_custom_call.1} parent=15 // pred_region
          %p179 = scmp.lt.s32.totalorder %s23, 3
          %s180 = scalar_select %p179, %s23, 3
          %s181 = smul.addr %s180, 2
          %s182 = scalar_lea.vmem %s1, %s181
        $region24: #{tpu_custom_call.1} parent=15 // pred_fallthru
          _
        // Predicated region
        $region25: #{tpu_custom_call.1} parent=15 // pred_check
          %p183 = pneg %p101
        $region26: #{tpu_custom_call.1} parent=15 // pred_check_branch
          %185 = sbr.rel (%p183) target = $region28
        $region27: #{tpu_custom_call.1} parent=15 // pred_region
          %p186 = scmp.lt.s32.totalorder %s23, 3
          %s187 = scalar_select %p186, %s23, 3
          %s188 = smul.addr %s187, 2
          %s189 = scalar_lea.vmem %s2, %s188
        $region28: #{tpu_custom_call.1} parent=15 // pred_fallthru
          _
      $region16: #{tpu_custom_call.1} parent=5 // pred_fallthru
        _
      %p190 = scmp.le.s32.totalorder 1, %s15
      %p191 = scmp.lt.s32.totalorder %s15, 9
      %p192 = pnand %p190, %p191
      %p193 = pneg %p192
      // Predicated region
      $region29: #{tpu_custom_call.1} parent=5 // pred_check
        _
      $region30: #{tpu_custom_call.1} parent=5 // pred_check_branch
        %195 = sbr.rel (%p192) target = $region32
      $region31: #{tpu_custom_call.1} parent=5 // pred_region
        %s196 = ssub.s32 %s15, 1
        %s197 = sand.u32 %s42, 1
        %s198 = scalar_lea.sflag [#allocation3], %s197
        %s199 = sand.u32 %s42, 1
        %s200 = smul.addr %s199, 4
        %s201 = scalar_lea.vmem [#allocation2], %s200
        // Predicated region
        $region33: #{tpu_custom_call.1} parent=31 // pred_check
          %p202 = pneg %p55
        $region34: #{tpu_custom_call.1} parent=31 // pred_check_branch
          %204 = sbr.rel (%p202) target = $region36
        $region35: #{tpu_custom_call.1} parent=31 // pred_region
          %206 = dma.done %s198, 64
        $region36: #{tpu_custom_call.1} parent=31 // pred_fallthru
          _
        %s207 = sand.u32 %s42, 1
        %s208 = scalar_lea.sflag [#allocation3], %s207
        %s209 = sand.u32 %s42, 1
        %s210 = smul.addr %s209, 4
        %s211 = scalar_lea.vmem [#allocation2], %s210
        %p212 = pneg %p55
        %p213 = pneg %p52
        %p214 = scmp.lt.s32.totalorder %s25, 3
        %s215 = scalar_select %p214, %s25, 3
        %s216 = smul.addr %s215, 2
        %s217 = scalar_lea.vmem %s1, %s216
        %p218 = pneg %p81
        %p219 = pneg %p78
        %p220 = scmp.lt.s32.totalorder %s25, 3
        %s221 = scalar_select %p220, %s25, 3
        %s222 = smul.addr %s221, 2
        %s223 = scalar_lea.vmem %s2, %s222
        %p224 = pneg %p107
        %p225 = pneg %p104
        %p226 = pneg %p135
        %p227 = pneg %p132
        %s228 = sand.u32 %s122, 1
        %s229 = scalar_lea.sflag [#allocation4], %s228
        %s230 = sand.u32 %s122, 1
        %s231 = smul.addr %s230, 4
        %s232 = scalar_lea.vmem [#allocation5], %s231
        %p233 = scmp.lt.s32.totalorder %s25, 3
        %s234 = scalar_select %p233, %s25, 3
        %s235 = smul.addr %s234, 2
        %s236 = scalar_lea.vmem %s1, %s235
        %p237 = scmp.lt.s32.totalorder %s25, 3
        %s238 = scalar_select %p237, %s25, 3
        %s239 = smul.addr %s238, 2
        %s240 = scalar_lea.vmem %s2, %s239
        %v241 = vld [vmem:[%s201] sm:$0xf]
        %243 = vst [vmem:[#allocation1] ss:$4 sm:$0xff] %v241
        %v244 = vld.sshfl [vmem:[#allocation1] sm:$0xff pattern:$0x73625140]
        %v245 = vld.sshfl [vmem:[#allocation1 + $0x8] sm:$0xff pattern:$0x73625140]
        %vm248 = vcmask 1041408
        %v249 = vsel %vm248, %v244, 0.0
        %v250 = vsel %vm248, %v245, 0.0
        %v251 = vadd.f32 %v249, %v250
        %252 = vadd.xlane.f32.xlu0 %v251
        %v253 = vpop.xlane.xlu0 %252
        %v254 = vrot.slane %v253, 4
        %v255 = vadd.f32 %v253, %v254
        %v256 = vrot.slane %v255, 2
        %v257 = vadd.f32 %v255, %v256
        %v258 = vrot.slane %v257, 1
        %v259 = vadd.f32 %v257, %v258
        %s260 = vtos %v259
        %v261 = vstv %s260
        %v262 = vadd.f32 %v261, 0.0
        %v263 = vmul.f32 %v262, 0.001953125
        %v264 = vsub.f32 %v241, %v263
        %v265 = vmul.f32 %v264, %v264
        %267 = vst [vmem:[#allocation1] ss:$4 sm:$0xff] %v265
        %v268 = vld.sshfl [vmem:[#allocation1] sm:$0xff pattern:$0x73625140]
        %v269 = vld.sshfl [vmem:[#allocation1 + $0x8] sm:$0xff pattern:$0x73625140]
        %v272 = vsel %vm248, %v268, 0.0
        %v273 = vsel %vm248, %v269, 0.0
        %v274 = vadd.f32 %v272, %v273
        %275 = vadd.xlane.f32.xlu0 %v274
        %v276 = vpop.xlane.xlu0 %275
        %v277 = vrot.slane %v276, 4
        %v278 = vadd.f32 %v276, %v277
        %v279 = vrot.slane %v278, 2
        %v280 = vadd.f32 %v278, %v279
        %v281 = vrot.slane %v280, 1
        %v282 = vadd.f32 %v280, %v281
        %s283 = vtos %v282
        %v284 = vstv %s283
        %v285 = vadd.f32 %v284, 0.0
        %v286 = vmul.f32 %v285, 0.0019569471
        %v287 = vmax.f32 %v286, 0.0
        %v288 = vrsqrt.pop %v287
        %v289 = vmul.f32 %v288, %v287
        %v290 = vmul.f32 %v289, %v288
        %v291 = vmul.f32 0.5, %v290
        %v292 = vsub.f32 1.5, %v291
        %v293 = vmul.f32 %v288, %v292
        %v294 = vmul.f32 %v287, %v293
        %vm295 = vcmp.eq.f32.partialorder %v287, inf
        %v296 = vsel %vm295, %v287, %v294
        %vm297 = vcmp.eq.f32.partialorder %v287, 0.0
        %v298 = vand.u32 %v287, 2147483648
        %v299 = vsel %vm297, %v298, %v296
        %v300 = vadd.f32 %v299, 1e-10
        %v301 = vrcp.pop %v300
        %v302 = vmul.f32 %v300, %v301
        %v303 = vsub.f32 1.0, %v302
        %v304 = vmul.f32 %v301, %v303
        %v305 = vadd.f32 %v301, %v304
        %vm306 = vweird.f32 %v300
        %vm307 = vweird.f32 %v301
        %vm308 = vmor %vm306, %vm307
        %v309 = vsel %vm308, %v301, %v305
        %v310 = vand.u32 2147483647, %v300
        %vm311 = vcmp.eq.f32.partialorder %v310, 8.507059e+37
        %v312 = vand.u32 %v300, 2147483648
        %v313 = vor.u32 1.1754944e-38, %v312
        %v314 = vsel %vm311, %v313, %v309
        %v315 = vmul.f32 1.0, %v314
        %v316 = vld [vmem:[%s236] sm:$0x3]
        %v317 = vld [vmem:[%s240] sm:$0x3]
        %v318 = vmul.f32 %v316, %v315
        %v319 = vmul.f32 %v263, %v318
        %v320 = vsub.f32 %v317, %v319
        %322 = vset.pattern.permute.xlu0 0
        %323 = vperm.xlu0 %322, %v318
        %v324 = vpop.permute.xlu0 %323
        %326 = vset.pattern.permute.xlu0 0
        %327 = vperm.xlu0 %326, %v320
        %v328 = vpop.permute.xlu0 %327
        %v330 = vunpack.c.l.s4 269488144
        %v331 = vunpack.c.0.s8 %v330
        %v332 = vperm.slane %v324, %v331
        %v334 = vmul.f32 %v241, %v332
        %v336 = vunpack.c.l.s4 269488144
        %v337 = vunpack.c.0.s8 %v336
        %v338 = vperm.slane %v328, %v337
        %v340 = vadd.f32 %v334, %v338
        %341 = vst [vmem:[%s232] sm:$0xf] %v340
        %s342 = sand.u32 %s122, 1
        %s343 = scalar_lea.sflag [#allocation4], %s342
        %s344 = sand.u32 %s122, 1
        %s345 = smul.addr %s344, 4
        %s346 = scalar_lea.vmem [#allocation5], %s345
        // Predicated region
        $region37: #{tpu_custom_call.1} parent=31 // pred_check
          %p347 = pneg %p132
        $region38: #{tpu_custom_call.1} parent=31 // pred_check_branch
          %349 = sbr.rel (%p347) target = $region40
        $region39: #{tpu_custom_call.1} parent=31 // pred_region
          %351 = vsyncadd %s343, 0
          %s352 = smul.addr %s25, 2
          %s353 = smul.addr %s24, 8
          %s354 = sadd.s32 %s352, %s353
          %s355 = smul.addr %s354, 2
          %s356 = scalar_lea.hbm %s3, %s355
          %s358 = sshll.u32 %s346, 4
          %s359 = int_to_ptr.vmem [resolvable:$true] %s358
          %s360 = sshll.u32 %s356, 4
          %s361 = int_to_ptr.hbm [resolvable:$true] %s360
          %363 = dma.vmem_to_hbm [thread:$0]  %s359, 64, %s361, %s343
        $region40: #{tpu_custom_call.1} parent=31 // pred_fallthru
          _
      $region32: #{tpu_custom_call.1} parent=5 // pred_fallthru
        _
      %p364 = scmp.le.s32.totalorder 2, %s15
      // Predicated region
      $region41: #{tpu_custom_call.1} parent=5 // pred_check
        %p365 = pneg %p364
      $region42: #{tpu_custom_call.1} parent=5 // pred_check_branch
        %367 = sbr.rel (%p365) target = $region44
      $region43: #{tpu_custom_call.1} parent=5 // pred_region
        %s368 = ssub.s32 %s15, 2
        // Predicated region
        $region45: #{tpu_custom_call.1} parent=43 // pred_check
          %p369 = pneg %p138
        $region46: #{tpu_custom_call.1} parent=43 // pred_check_branch
          %371 = sbr.rel (%p369) target = $region48
        $region47: #{tpu_custom_call.1} parent=43 // pred_region
          %s372 = sand.u32 %s123, 1
          %s373 = scalar_lea.sflag [#allocation4], %s372
          %s374 = sand.u32 %s123, 1
          %s375 = smul.addr %s374, 4
          %s376 = scalar_lea.vmem [#allocation5], %s375
          %378 = dma.done %s373, 64
        $region48: #{tpu_custom_call.1} parent=43 // pred_fallthru
          _
      $region44: #{tpu_custom_call.1} parent=5 // pred_fallthru
        _
    $region6: #{tpu_custom_call.1} parent=1 // loop_footer
      %s19 = sadd.s32 1, %s15
    $region7: #{tpu_custom_call.1} parent=1 // loop_footer_branch
      %14 = sbr.rel target = $region3
    $region8: #{tpu_custom_call.1} parent=1 // loop_exit
      _
    %379 = vsyncpa [#allocation3], 1
    %s380 = scalar_lea.sflag [#allocation3], 1
    %381 = vsyncpa %s380, 1
    %382 = vsyncpa [#allocation4], 1
    %s383 = scalar_lea.sflag [#allocation4], 1
    %384 = vsyncpa %s383, 1

</llo_original>
